<compile_context>
chip_gen: v6e
topology: v6e:2x2x1
jax: 0.10.0
libtpu: 0.0.40
codegen_flags: <defaults>
</compile_context>

<pallas_src>
import functools

import jax
import jax.numpy as jnp
from jax import lax
from jax.experimental import pallas as pl
from jax.experimental.pallas import tpu as pltpu


def _round_up(x, m):
    return (x + m - 1) // m * m


def conv_tanh_kernel(x_ref, w_ref, o_ref, *, H, W):
    """One grid step: `imgs` images -> one fused-K MXU matmul -> tanh.

    x_ref : (imgs, Cin, H*W)  lane-dense input slab(s)
    w_ref : (Cout, Kp)        fused weights: 9 taps x Cin columns, then the
                              bias column (paired with a ones row), then zero
                              columns up to the sublane-aligned Kp.
    o_ref : (imgs, Cout, H*W) lane-dense output
    """
    imgs, Cin, HW = x_ref.shape
    Kp = w_ref.shape[1]
    K = 9 * Cin

    # Boundary masks depend only on the lane position: one (1, HW) iota,
    # broadcast inside jnp.where.  W is a power of two -> `% W` is an AND.
    lane = lax.broadcasted_iota(jnp.int32, (1, HW), 1)
    col = lane % W
    top = lane < W               # y == 0
    bot = lane >= HW - W         # y == H - 1
    left = col == 0              # x == 0
    right = col == W - 1         # x == W - 1

    # Build the im2col operand in registers (no VMEM scratch, no masked
    # partial stores).  Rolls are circular (XLU slot); boundary lanes keep
    # their own value instead, which realizes replicate ("edge") padding.
    taps = [[] for _ in range(9)]          # 9 taps x imgs slabs of (Cin, HW)
    for b in range(imgs):
        x = x_ref[b]                                                   # (Cin, HW)
        x_up = jnp.where(top, x, pltpu.roll(x, shift=W, axis=1))       # ky = 0
        x_dn = jnp.where(bot, x, pltpu.roll(x, shift=HW - W, axis=1))  # ky = 2
        vert = (x_up, x, x_dn)
        for ky in range(3):
            xv = vert[ky]
            x_l = jnp.where(left, xv, pltpu.roll(xv, shift=1, axis=1))        # kx = 0
            x_r = jnp.where(right, xv, pltpu.roll(xv, shift=HW - 1, axis=1))  # kx = 2
            horiz = (x_l, xv, x_r)
            for kx in range(3):
                taps[ky * 3 + kx].append(horiz[kx])

    L = imgs * HW
    # Tap-major, channel-minor rows (matches the fused weight column order),
    # plus the ones row (carries the bias) and zero rows up to Kp.
    rows = [t[0] if imgs == 1 else jnp.concatenate(t, axis=1) for t in taps]
    rows.append(jnp.ones((1, L), jnp.float32))                 # bias row
    if Kp > K + 1:
        rows.append(jnp.zeros((Kp - K - 1, L), jnp.float32))   # alignment pad
    patch = jnp.concatenate(rows, axis=0)                      # (Kp, L)

    # Single fat MXU matmul covering every image in this step, f32 accumulate.
    acc = jnp.dot(w_ref[...], patch, preferred_element_type=jnp.float32)
    y = jnp.tanh(acc)                                          # (Cout, L)

    # Per-image lane slices (HW is a multiple of 128 here -> aligned stores).
    for b in range(imgs):
        o_ref[b] = y[:, b * HW:(b + 1) * HW].astype(o_ref.dtype)


def prepare_convtanh_params(weight, bias):
    """Fold Conv2d weight+bias into one (Cout, Kp) matmul operand.

    Done once, outside the per-forward path (review: hoist the reshuffle).
    Column layout: (ky*3 + kx)*Cin + ci for the 9 taps, then the bias column,
    then zero columns up to Kp = round_up(9*Cin + 1, 8).
    """
    Cout, Cin, KH, KW = weight.shape
    assert (KH, KW) == (3, 3), "kernel_size=3 expected"
    K = KH * KW * Cin
    Kp = _round_up(K + 1, 8)
    w_mat = jnp.transpose(weight, (0, 2, 3, 1)).reshape(Cout, K).astype(jnp.float32)
    return jnp.concatenate(
        [w_mat,
         bias.reshape(Cout, 1).astype(jnp.float32),
         jnp.zeros((Cout, Kp - K - 1), jnp.float32)],
        axis=1)


def _images_per_step(N, HW, max_lanes=512):
    """Images folded into the lane axis of one grid step."""
    per = 1
    for d in range(1, N + 1):
        if N % d == 0 and d * HW <= max_lanes:   # keep the register-built patch small
            per = d
    # Keep >= 2 grid steps when the batch allows it: v7x has 2 TensorCores and
    # shards "parallel" grid axes across them (one step would idle a core).
    if N >= 2 and N // per < 2:
        per = max(d for d in range(1, N) if N % d == 0 and N // d >= 2)
    return per


def convtanh_forward(x_nchw, w_fused):
    """Forward pass of Convtanh.

    x_nchw  : (N, Cin, H, W)  float32
    w_fused : (Cout, Kp)      from prepare_convtanh_params()
    returns : (N, Cout, H, W) float32
    """
    N, Cin, H, W = x_nchw.shape
    Cout, Kp = w_fused.shape
    HW = H * W

    x_flat = x_nchw.reshape(N, Cin, HW)      # layout-only reshape (no transpose)

    B = _images_per_step(N, HW)              # images per grid step
    G = N // B                               # grid steps

    kernel = functools.partial(conv_tanh_kernel, H=H, W=W)

    # Per-step VMEM budget: double-buffered in/out blocks, resident weights,
    # and headroom in case the register-built patch spills to VMEM.
    per_step_bytes = 4 * (2 * B * Cin * HW + 2 * B * Cout * HW
                          + 2 * Cout * Kp + Kp * B * HW)
    vmem_limit = int(min(32 * 1024 * 1024,
                         max(8 * 1024 * 1024, 4 * per_step_bytes)))

    out_flat = pl.pallas_call(
        kernel,
        out_shape=jax.ShapeDtypeStruct((N, Cout, HW), x_nchw.dtype),
        grid=(G,),
        in_specs=[
            pl.BlockSpec((B, Cin, HW), lambda s: (s, 0, 0)),
            pl.BlockSpec((Cout, Kp), lambda s: (0, 0)),   # weights stay resident
        ],
        out_specs=pl.BlockSpec((B, Cout, HW), lambda s: (s, 0, 0)),
        compiler_params=pltpu.CompilerParams(
            dimension_semantics=("parallel",),
            vmem_limit_bytes=vmem_limit),
    )(x_flat, w_fused)

    return out_flat.reshape(N, Cout, H, W)


def _reference(x_nchw, weight, bias):
    # Pure-JAX reference: replicate pad + VALID conv + tanh.
    x_pad = jnp.pad(x_nchw, ((0, 0), (0, 0), (1, 1), (1, 1)), mode="edge")
    y = lax.conv_general_dilated(
        x_pad, weight, window_strides=(1, 1), padding="VALID",
        dimension_numbers=("NCHW", "OIHW", "NCHW"))
    return jnp.tanh(y + bias[None, :, None, None])


if __name__ == "__main__":
    key = jax.random.PRNGKey(0)
    k_x, k_w, k_b = jax.random.split(key, 3)

    N, Cin, Cout, H, W = 2, 4, 8, 16, 16

    x = jax.random.normal(k_x, (N, Cin, H, W), dtype=jnp.float32)
    # Deterministic parameter init of matching shape (synthetic weights).
    fan_in = Cin * 3 * 3
    bound = 1.0 / (fan_in ** 0.5)
    weight = jax.random.uniform(k_w, (Cout, Cin, 3, 3), jnp.float32,
                                minval=-bound, maxval=bound)
    bias = jax.random.uniform(k_b, (Cout,), jnp.float32,
                              minval=-bound, maxval=bound)

    w_fused = prepare_convtanh_params(weight, bias)   # hoisted out of forward
    out = convtanh_forward(x, w_fused)
    out = jax.block_until_ready(out)

    ref = _reference(x, weight, bias)
    assert out.shape == (N, Cout, H, W)
    assert jnp.allclose(out, ref, atol=1e-5, rtol=1e-5), "mismatch vs reference"

    print("KERNEL_OK")
</pallas_src>

<mosaic_0001>
module attributes {stable_mosaic.version = 11 : i64} {
  func.func @conv_tanh_kernel(%arg0: i32, %arg1: memref<1x4x256xf32, #tpu.memory_space<vmem>>, %arg2: memref<8x40xf32, #tpu.memory_space<vmem>>, %arg3: memref<1x8x256xf32, #tpu.memory_space<vmem>>) attributes {dimension_semantics = [#tpu.dimension_semantics<parallel>], iteration_bounds = array<i64: 2>, scalar_prefetch = 0 : i64, scratch_operands = 0 : i64, tpu.core_type = #tpu.core_type<tc>, window_params = [{transform_indices = @transform_0, window_bounds = array<i64: 1, 4, 256>}, {pipeline_mode = #tpu.pipeline_mode<synchronous>, transform_indices = @transform_1, window_bounds = array<i64: 8, 40>}, {transform_indices = @transform_2, window_bounds = array<i64: 1, 8, 256>}]} {
    %0 = tpu.iota {dimensions = array<i32: 1>} : vector<1x256xi32>
    %c16_i32 = arith.constant 16 : i32
    %c0_i32 = arith.constant 0 : i32
    %1 = arith.cmpi eq, %c16_i32, %c0_i32 : i32
    %c1_i32 = arith.constant 1 : i32
    %2 = arith.select %1, %c1_i32, %c16_i32 : i32
    %3 = vector.broadcast %2 : i32 to vector<1x256xi32>
    %4 = arith.remsi %0, %3 : vector<1x256xi32>
    %c0_i32_0 = arith.constant 0 : i32
    %5 = vector.broadcast %c0_i32_0 : i32 to vector<1x256xi32>
    %6 = arith.cmpi ne, %4, %5 : vector<1x256xi32>
    %c0_i32_1 = arith.constant 0 : i32
    %7 = vector.broadcast %c0_i32_1 : i32 to vector<1x256xi32>
    %8 = arith.cmpi slt, %4, %7 : vector<1x256xi32>
    %c0_i32_2 = arith.constant 0 : i32
    %9 = arith.cmpi slt, %2, %c0_i32_2 : i32
    %10 = vector.broadcast %9 : i1 to vector<1x256xi1>
    %11 = vector.broadcast %10 : vector<1x256xi1> to vector<1x256xi1>
    %12 = arith.xori %8, %11 : vector<1x256xi1>
    %13 = arith.andi %12, %6 : vector<1x256xi1>
    %14 = vector.broadcast %2 : i32 to vector<1x256xi32>
    %15 = arith.addi %4, %14 : vector<1x256xi32>
    %16 = arith.select %13, %15, %4 : vector<1x256xi1>, vector<1x256xi32>
    %c16_i32_3 = arith.constant 16 : i32
    %17 = vector.broadcast %c16_i32_3 : i32 to vector<1x256xi32>
    %18 = arith.cmpi slt, %0, %17 : vector<1x256xi32>
    %c240_i32 = arith.constant 240 : i32
    %19 = vector.broadcast %c240_i32 : i32 to vector<1x256xi32>
    %20 = arith.cmpi sge, %0, %19 : vector<1x256xi32>
    %c0_i32_4 = arith.constant 0 : i32
    %21 = vector.broadcast %c0_i32_4 : i32 to vector<1x256xi32>
    %22 = arith.cmpi eq, %16, %21 : vector<1x256xi32>
    %c15_i32 = arith.constant 15 : i32
    %23 = vector.broadcast %c15_i32 : i32 to vector<1x256xi32>
    %24 = arith.cmpi eq, %16, %23 : vector<1x256xi32>
    %c0 = arith.constant 0 : index
    %c0_5 = arith.constant 0 : index
    %c0_6 = arith.constant 0 : index
    %25 = vector.load %arg1[%c0, %c0_5, %c0_6] : memref<1x4x256xf32, #tpu.memory_space<vmem>>, vector<1x4x256xf32>
    %26 = vector.shape_cast %25 : vector<1x4x256xf32> to vector<4x256xf32>
    %c16_i32_7 = arith.constant 16 : i32
    %27 = tpu.dynamic_rotate %26 by %c16_i32_7 dim 1 : vector<4x256xf32>, i32 -> vector<4x256xf32>
    %28 = vector.shape_cast %18 : vector<1x256xi1> to vector<1x256xi1>
    %29 = vector.broadcast %28 : vector<1x256xi1> to vector<4x256xi1>
    %30 = arith.select %29, %26, %27 : vector<4x256xi1>, vector<4x256xf32>
    %c240_i32_8 = arith.constant 240 : i32
    %31 = tpu.dynamic_rotate %26 by %c240_i32_8 dim 1 : vector<4x256xf32>, i32 -> vector<4x256xf32>
    %32 = vector.shape_cast %20 : vector<1x256xi1> to vector<1x256xi1>
    %33 = vector.broadcast %32 : vector<1x256xi1> to vector<4x256xi1>
    %34 = arith.select %33, %26, %31 : vector<4x256xi1>, vector<4x256xf32>
    %c1_i32_9 = arith.constant 1 : i32
    %35 = tpu.dynamic_rotate %30 by %c1_i32_9 dim 1 : vector<4x256xf32>, i32 -> vector<4x256xf32>
    %36 = vector.shape_cast %22 : vector<1x256xi1> to vector<1x256xi1>
    %37 = vector.broadcast %36 : vector<1x256xi1> to vector<4x256xi1>
    %38 = arith.select %37, %30, %35 : vector<4x256xi1>, vector<4x256xf32>
    %c255_i32 = arith.constant 255 : i32
    %39 = tpu.dynamic_rotate %30 by %c255_i32 dim 1 : vector<4x256xf32>, i32 -> vector<4x256xf32>
    %40 = vector.shape_cast %24 : vector<1x256xi1> to vector<1x256xi1>
    %41 = vector.broadcast %40 : vector<1x256xi1> to vector<4x256xi1>
    %42 = arith.select %41, %30, %39 : vector<4x256xi1>, vector<4x256xf32>
    %c1_i32_10 = arith.constant 1 : i32
    %43 = tpu.dynamic_rotate %26 by %c1_i32_10 dim 1 : vector<4x256xf32>, i32 -> vector<4x256xf32>
    %44 = vector.shape_cast %22 : vector<1x256xi1> to vector<1x256xi1>
    %45 = vector.broadcast %44 : vector<1x256xi1> to vector<4x256xi1>
    %46 = arith.select %45, %26, %43 : vector<4x256xi1>, vector<4x256xf32>
    %c255_i32_11 = arith.constant 255 : i32
    %47 = tpu.dynamic_rotate %26 by %c255_i32_11 dim 1 : vector<4x256xf32>, i32 -> vector<4x256xf32>
    %48 = vector.shape_cast %24 : vector<1x256xi1> to vector<1x256xi1>
    %49 = vector.broadcast %48 : vector<1x256xi1> to vector<4x256xi1>
    %50 = arith.select %49, %26, %47 : vector<4x256xi1>, vector<4x256xf32>
    %c1_i32_12 = arith.constant 1 : i32
    %51 = tpu.dynamic_rotate %34 by %c1_i32_12 dim 1 : vector<4x256xf32>, i32 -> vector<4x256xf32>
    %52 = vector.shape_cast %22 : vector<1x256xi1> to vector<1x256xi1>
    %53 = vector.broadcast %52 : vector<1x256xi1> to vector<4x256xi1>
    %54 = arith.select %53, %34, %51 : vector<4x256xi1>, vector<4x256xf32>
    %c255_i32_13 = arith.constant 255 : i32
    %55 = tpu.dynamic_rotate %34 by %c255_i32_13 dim 1 : vector<4x256xf32>, i32 -> vector<4x256xf32>
    %56 = vector.shape_cast %24 : vector<1x256xi1> to vector<1x256xi1>
    %57 = vector.broadcast %56 : vector<1x256xi1> to vector<4x256xi1>
    %58 = arith.select %57, %34, %55 : vector<4x256xi1>, vector<4x256xf32>
    %cst = arith.constant 1.000000e+00 : f32
    %59 = vector.broadcast %cst : f32 to vector<1x256xf32>
    %cst_14 = arith.constant 0.000000e+00 : f32
    %60 = vector.broadcast %cst_14 : f32 to vector<3x256xf32>
    %61 = tpu.concatenate %38, %30, %42, %46, %26, %50, %54, %34, %58, %59, %60 in 0 : vector<4x256xf32>, vector<4x256xf32>, vector<4x256xf32>, vector<4x256xf32>, vector<4x256xf32>, vector<4x256xf32>, vector<4x256xf32>, vector<4x256xf32>, vector<4x256xf32>, vector<1x256xf32>, vector<3x256xf32> -> vector<40x256xf32>
    %c0_15 = arith.constant 0 : index
    %c0_16 = arith.constant 0 : index
    %62 = vector.load %arg2[%c0_15, %c0_16] : memref<8x40xf32, #tpu.memory_space<vmem>>, vector<8x40xf32>
    %cst_17 = arith.constant dense<0.000000e+00> : vector<8x256xf32>
    %63 = tpu.matmul %62, %61, %cst_17 {dimension_numbers = #tpu.dot_dimension_numbers<[1], [0], [0], [1], [0, 0, 1, 1], [], []>} : vector<8x40xf32>, vector<40x256xf32>, vector<8x256xf32> -> vector<8x256xf32>
    %64 = math.tanh %63 : vector<8x256xf32>
    %c0_18 = arith.constant 0 : index
    %c0_19 = arith.constant 0 : index
    %c0_20 = arith.constant 0 : index
    %65 = vector.load %arg3[%c0_18, %c0_19, %c0_20] : memref<1x8x256xf32, #tpu.memory_space<vmem>>, vector<1x8x256xf32>
    %66 = vector.shape_cast %65 : vector<1x8x256xf32> to vector<8x256xf32>
    %67 = vector.shape_cast %64 : vector<8x256xf32> to vector<1x8x256xf32>
    tpu.vector_store %arg3[%c0_18, %c0_19, %c0_20], %67 {strides = array<i32>} : memref<1x8x256xf32, #tpu.memory_space<vmem>>, vector<1x8x256xf32>,
    return
  }
  func.func @transform_0(%arg0: i32) -> (i32, i32, i32) {
    %c0_i32 = arith.constant 0 : i32
    %c0_i32_0 = arith.constant 0 : i32
    %c0_i32_1 = arith.constant 0 : i32
    return %arg0, %c0_i32, %c0_i32_0 : i32, i32, i32
  }
  func.func @transform_1(%arg0: i32) -> (i32, i32) {
    %c0_i32 = arith.constant 0 : i32
    %c0_i32_0 = arith.constant 0 : i32
    %c0_i32_1 = arith.constant 0 : i32
    return %c0_i32, %c0_i32_0 : i32, i32
  }
  func.func @transform_2(%arg0: i32) -> (i32, i32, i32) {
    %c0_i32 = arith.constant 0 : i32
    %c0_i32_0 = arith.constant 0 : i32
    %c0_i32_1 = arith.constant 0 : i32
    return %arg0, %c0_i32, %c0_i32_0 : i32, i32, i32
  }
}

</mosaic_0001>

<llo_original>
// kernel: tpu_custom_call.1
$region0: #{tpu_custom_call.1}
  #allocation0 [shape = 'u32[]', space=smem, size = 0x4, offset = 0x4, fixed_abs, tag = 'smem constant byte address 0x4 - core index']
  #allocation1 [shape = 'u32[144,128]{1,0:T(1,128)}', space=vmem, size = 0x12000, scoped, tag = 'internal scratch']
  %s0 = inlined_call_operand.hbm [shape: f32[2,4,256], index: 0, kind: input, shape index: {}]
  %s1 = inlined_call_operand.hbm [shape: f32[8,40], index: 1, kind: input, shape index: {}]
  %s2 = inlined_call_operand.hbm [shape: f32[2,8,256], index: 2, kind: output, shape index: {}]
  %s3 = sld [smem:[#allocation0]]
  $region49: #{tpu_custom_call.1} parent=0
    _
  %s5 = ssub.s32 1, %s3
  %s6 = scalar_select 0, %s5, %s3
  $region1: #{tpu_custom_call.1} parent=0
    #allocation2 [shape = 'u8[8192]{0}', space=vmem, size = 0x2000, scoped, tag = 'input window, operand 0']
    #allocation3 [shape = 's32[2]{0}', space=sflag, size = 0x8, scoped, tag = 'scoped memory for tpu_custom_call.1']
    #allocation4 [shape = 's32[2]{0}', space=sflag, size = 0x8, scoped, tag = 'scoped memory for tpu_custom_call.1']
    #allocation5 [shape = 'u8[4096]{0}', space=vmem, size = 0x1000, scoped, tag = 'input window, operand 1, single buffered']
    #allocation6 [shape = 's32[1]{0}', space=sflag, size = 0x4, scoped, tag = 'scoped memory for tpu_custom_call.1']
    #allocation7 [shape = 'u8[16384]{0}', space=vmem, size = 0x4000, scoped, tag = 'output window, operand 0']
    %7 = vsyncpa [#allocation3], 0
    %s8 = scalar_lea.sflag [#allocation3], 1
    %9 = vsyncpa %s8, 0
    %10 = vsyncpa [#allocation6], 0
    %11 = vsyncpa [#allocation4], 0
    %s12 = scalar_lea.sflag [#allocation4], 1
    %13 = vsyncpa %s12, 0
    loop: start=0, step=1, limit=4
    $region2: #{tpu_custom_call.1} parent=1 // loop_pre_header
      _
    $region3: #{tpu_custom_call.1} parent=1 // loop_header
      %s15 = sphi 0, %s19
      %p16 = scmp.ge.s32.totalorder %s15, 4
      %s25 = sphi 0, %s27
      %s28 = sphi 0, %s25
      %s29 = sphi 0, %s28
      %s45 = sphi 0, %s29
      %s49 = sphi 0, %s49
      %s51 = sphi 0, %s49
      %s52 = sphi 0, %s51
      %s66 = sphi 0, %s52
      %s72 = sphi 0, %s74
      %s75 = sphi 0, %s72
      %s76 = sphi 0, %s75
      %s92 = sphi 0, %s76
    $region4: #{tpu_custom_call.1} parent=1 // loop_header_branch
      %18 = sbr.rel (%p16) target = $region8
    $region5: #{tpu_custom_call.1} parent=1 // loop_body
      %s20 = ssub.s32 %s15, 1
      %s21 = ssub.s32 %s15, 2
      %s22 = sadd.s32 %s15, 1
      %s23 = ssub.s32 %s15, %s22
      %p24 = scmp.eq.s32.totalorder %s23, 0
      %s26 = sadd.s32 %s25, 1
      %s27 = scalar_select %p24, %s25, %s26
      %p30 = pneg %p24
      %p31 = scmp.eq.s32.totalorder %s15, 1
      %p32 = por %p30, %p31
      %p33 = scmp.ne.s32.totalorder %s25, %s28
      %p34 = scmp.eq.s32.totalorder %s15, 0
      %p35 = por %p33, %p34
      %p36 = scmp.ne.s32.totalorder %s25, %s28
      %p37 = scmp.eq.s32.totalorder %s20, 1
      %p38 = por %p36, %p37
      %p39 = scmp.ne.s32.totalorder %s28, %s29
      %p40 = scmp.eq.s32.totalorder %s20, 0
      %p41 = por %p39, %p40
      %p42 = scmp.ne.s32.totalorder %s28, %s29
      %p43 = scmp.eq.s32.totalorder %s21, 1
      %p44 = por %p42, %p43
      %p46 = scmp.ne.s32.totalorder %s29, %s45
      %p47 = scmp.eq.s32.totalorder %s21, 0
      %p48 = por %p46, %p47
      %s50 = sadd.s32 %s49, 1
      %p53 = scmp.eq.s32.totalorder %s15, 1
      %p54 = scmp.ne.s32.totalorder %s49, %s51
      %p55 = scmp.eq.s32.totalorder %s15, 0
      %p56 = por %p54, %p55
      %p57 = scmp.ne.s32.totalorder %s49, %s51
      %p58 = scmp.eq.s32.totalorder %s20, 1
      %p59 = por %p57, %p58
      %p60 = scmp.ne.s32.totalorder %s51, %s52
      %p61 = scmp.eq.s32.totalorder %s20, 0
      %p62 = por %p60, %p61
      %p63 = scmp.ne.s32.totalorder %s51, %s52
      %p64 = scmp.eq.s32.totalorder %s21, 1
      %p65 = por %p63, %p64
      %p67 = scmp.ne.s32.totalorder %s52, %s66
      %p68 = scmp.eq.s32.totalorder %s21, 0
      %p69 = por %p67, %p68
      %s70 = ssub.s32 %s15, %s22
      %p71 = scmp.eq.s32.totalorder %s70, 0
      %s73 = sadd.s32 %s72, 1
      %s74 = scalar_select %p71, %s72, %s73
      %p77 = pneg %p71
      %p78 = scmp.eq.s32.totalorder %s15, 1
      %p79 = por %p77, %p78
      %p80 = scmp.ne.s32.totalorder %s72, %s75
      %p81 = scmp.eq.s32.totalorder %s15, 0
      %p82 = por %p80, %p81
      %p83 = scmp.ne.s32.totalorder %s72, %s75
      %p84 = scmp.eq.s32.totalorder %s20, 1
      %p85 = por %p83, %p84
      %p86 = scmp.ne.s32.totalorder %s75, %s76
      %p87 = scmp.eq.s32.totalorder %s20, 0
      %p88 = por %p86, %p87
      %p89 = scmp.ne.s32.totalorder %s75, %s76
      %p90 = scmp.eq.s32.totalorder %s21, 1
      %p91 = por %p89, %p90
      %p93 = scmp.ne.s32.totalorder %s76, %s92
      %p94 = scmp.eq.s32.totalorder %s21, 0
      %p95 = por %p93, %p94
      %p96 = scmp.le.s32.totalorder 1, %s15
      %p97 = scmp.lt.s32.totalorder %s15, 3
      %p98 = pnand %p96, %p97
      %p99 = pneg %p98
      // Predicated region
      $region9: #{tpu_custom_call.1} parent=5 // pred_check
        _
      $region10: #{tpu_custom_call.1} parent=5 // pred_check_branch
        %101 = sbr.rel (%p98) target = $region12
      $region11: #{tpu_custom_call.1} parent=5 // pred_region
        %s102 = ssub.s32 %s15, 1
        // Predicated region
        $region13: #{tpu_custom_call.1} parent=11 // pred_check
          %p103 = pneg %p62
        $region14: #{tpu_custom_call.1} parent=11 // pred_check_branch
          %105 = sbr.rel (%p103) target = $region16
        $region15: #{tpu_custom_call.1} parent=11 // pred_region
          %s107 = ssub.s32 128, 128
          %108 = vsyncadd [#allocation6], %s107
          %s110 = sshll.u32 [#allocation5], 4
          %s111 = int_to_ptr.vmem [resolvable:$true] %s110
          %113 = dma.hbm_to_vmem [thread:$0]  %s1, 128, %s111, [#allocation6]
        $region16: #{tpu_custom_call.1} parent=11 // pred_fallthru
          _
      $region12: #{tpu_custom_call.1} parent=5 // pred_fallthru
        _
      %p114 = scmp.lt.s32.totalorder %s15, 2
      // Predicated region
      $region17: #{tpu_custom_call.1} parent=5 // pred_check
        %p115 = pneg %p114
      $region18: #{tpu_custom_call.1} parent=5 // pred_check_branch
        %117 = sbr.rel (%p115) target = $region20
      $region19: #{tpu_custom_call.1} parent=5 // pred_region
        // Predicated region
        $region21: #{tpu_custom_call.1} parent=19 // pred_check
          %p118 = pneg %p35
        $region22: #{tpu_custom_call.1} parent=19 // pred_check_branch
          %120 = sbr.rel (%p118) target = $region24
        $region23: #{tpu_custom_call.1} parent=19 // pred_region
          %s121 = sand.u32 %s25, 1
          %s122 = scalar_lea.sflag [#allocation3], %s121
          %s123 = sand.u32 %s25, 1
          %s124 = smul.addr %s123, 8
          %s125 = scalar_lea.vmem [#allocation2], %s124
          %s127 = ssub.s32 128, 128
          %128 = vsyncadd %s122, %s127
          %s129 = smul.addr %s15, 2
          %s130 = smul.addr %s129, 64
          %s131 = scalar_lea.hbm %s0, %s130
          %s133 = sshll.u32 %s125, 4
          %s134 = int_to_ptr.vmem [resolvable:$true] %s133
          %136 = dma.hbm_to_vmem [thread:$0]  %s131, 128, %s134, %s122
        $region24: #{tpu_custom_call.1} parent=19 // pred_fallthru
          _
      $region20: #{tpu_custom_call.1} parent=5 // pred_fallthru
        _
      %p137 = scmp.le.s32.totalorder 1, %s15
      %p138 = scmp.lt.s32.totalorder %s15, 3
      %p139 = pnand %p137, %p138
      %p140 = pneg %p139
      // Predicated region
      $region25: #{tpu_custom_call.1} parent=5 // pred_check
        _
      $region26: #{tpu_custom_call.1} parent=5 // pred_check_branch
        %142 = sbr.rel (%p139) target = $region28
      $region27: #{tpu_custom_call.1} parent=5 // pred_region
        %s143 = ssub.s32 %s15, 1
        %s144 = sand.u32 %s28, 1
        %s145 = scalar_lea.sflag [#allocation3], %s144
        %s146 = sand.u32 %s28, 1
        %s147 = smul.addr %s146, 8
        %s148 = scalar_lea.vmem [#allocation2], %s147
        // Predicated region
        $region29: #{tpu_custom_call.1} parent=27 // pred_check
          %p149 = pneg %p41
        $region30: #{tpu_custom_call.1} parent=27 // pred_check_branch
          %151 = sbr.rel (%p149) target = $region32
        $region31: #{tpu_custom_call.1} parent=27 // pred_region
          %152 = dma.done %s145, 128
        $region32: #{tpu_custom_call.1} parent=27 // pred_fallthru
          _
        // Predicated region
        $region33: #{tpu_custom_call.1} parent=27 // pred_check
          %p153 = pneg %p62
        $region34: #{tpu_custom_call.1} parent=27 // pred_check_branch
          %155 = sbr.rel (%p153) target = $region36
        $region35: #{tpu_custom_call.1} parent=27 // pred_region
          %156 = dma.done [#allocation6], 128
        $region36: #{tpu_custom_call.1} parent=27 // pred_fallthru
          _
        %s157 = sand.u32 %s28, 1
        %s158 = scalar_lea.sflag [#allocation3], %s157
        %s159 = sand.u32 %s28, 1
        %s160 = smul.addr %s159, 8
        %s161 = scalar_lea.vmem [#allocation2], %s160
        %p162 = pneg %p41
        %p163 = pneg %p38
        %p164 = pneg %p62
        %p165 = pneg %p59
        %p166 = pneg %p88
        %p167 = pneg %p85
        %s168 = sand.u32 %s75, 1
        %s169 = scalar_lea.sflag [#allocation4], %s168
        %s170 = sand.u32 %s75, 1
        %s171 = smul.addr %s170, 16
        %s172 = scalar_lea.vmem [#allocation7], %s171
        %v173 = vlaneseq
        %v174 = vand.u32 %v173, 127
        %v175 = vadd.s32 %v174, 128
        %vm176 = vcmp.lt.s32.totalorder %v174, 0
        %v177 = vsub.s32 0, %v174
        %v178 = vsel %vm176, %v177, %v174
        %v179 = vshrl.u32 %v178, 4
        %v180 = vand.u32 %v178, 15
        %v181 = vsub.s32 0, %v180
        %v182 = vsel %vm176, %v181, %v180
        %vm183 = vcmp.lt.s32.totalorder %v175, 0
        %v184 = vsub.s32 0, %v175
        %v185 = vsel %vm183, %v184, %v175
        %v186 = vshrl.u32 %v185, 4
        %v187 = vand.u32 %v185, 15
        %v188 = vsub.s32 0, %v187
        %v189 = vsel %vm183, %v188, %v187
        %vm190 = vcmp.ne.s32.totalorder %v182, 0
        %vm191 = vcmp.ne.s32.totalorder %v189, 0
        %vm192 = vcmp.lt.s32.totalorder %v182, 0
        %vm193 = vcmp.lt.s32.totalorder %v189, 0
        %vm194 = vmand %vm192, %vm190
        %vm195 = vmand %vm193, %vm191
        %v196 = vadd.s32 %v182, 16
        %v197 = vadd.s32 %v189, 16
        %v198 = vsel %vm194, %v196, %v182
        %v199 = vsel %vm195, %v197, %v189
        %vm200 = vcmp.lt.s32.totalorder %v174, 16
        %vm201 = vcmp.lt.s32.totalorder %v175, 16
        %vm202 = vcmp.ge.s32.totalorder %v174, 240
        %vm203 = vcmp.ge.s32.totalorder %v175, 240
        %vm204 = vcmp.eq.s32.totalorder %v198, 0
        %vm205 = vcmp.eq.s32.totalorder %v199, 0
        %vm206 = vcmp.eq.s32.totalorder %v198, 15
        %vm207 = vcmp.eq.s32.totalorder %v199, 15
        %v208 = vld [vmem:[%s148] sm:$0xff]
        %v210 = vcombine.high %v208, %v208
        %212 = vrot.lane.b32.xlu0 %v208, 16
        %v213 = vpop.permute.xlu0 %212
        %214 = vrot.lane.b32.xlu0 %v210, 16
        %v215 = vpop.permute.xlu0 %214
        %v216 = vsel %vm200, %v213, %v215
        %v217 = vsel %vm200, %v215, %v213
        %v218 = vsel %vm200, 1, 0
        %v219 = vsel %vm201, 1, 0
        %vm220 = vcmp.eq.s32.totalorder %v218, 1
        %vm221 = vcmp.eq.s32.totalorder %v219, 1
        %v222 = vsel %vm220, %v208, %v217
        %v223 = vsel %vm221, %v210, %v216
        %224 = vrot.lane.b32.xlu0 %v208, 112
        %v225 = vpop.permute.xlu0 %224
        %226 = vrot.lane.b32.xlu0 %v210, 112
        %v227 = vpop.permute.xlu0 %226
        %vm228 = vcmp.lt.s32.totalorder %v174, 112
        %v229 = vsel %vm228, %v225, %v227
        %v230 = vsel %vm228, %v227, %v225
        %v231 = vsel %vm202, 1, 0
        %v232 = vsel %vm203, 1, 0
        %vm233 = vcmp.eq.s32.totalorder %v231, 1
        %vm234 = vcmp.eq.s32.totalorder %v232, 1
        %v235 = vsel %vm233, %v208, %v229
        %v236 = vsel %vm234, %v210, %v230
        %237 = vrot.lane.b32.xlu0 %v222, 1
        %v238 = vpop.permute.xlu0 %237
        %239 = vrot.lane.b32.xlu0 %v223, 1
        %v240 = vpop.permute.xlu0 %239
        %vm241 = vcmp.lt.s32.totalorder %v174, 1
        %v242 = vsel %vm241, %v238, %v240
        %v243 = vsel %vm241, %v240, %v238
        %v244 = vsel %vm204, 1, 0
        %v245 = vsel %vm205, 1, 0
        %vm246 = vcmp.eq.s32.totalorder %v244, 1
        %vm247 = vcmp.eq.s32.totalorder %v245, 1
        %v248 = vsel %vm246, %v222, %v243
        %v249 = vsel %vm247, %v223, %v242
        %250 = vrot.lane.b32.xlu0 %v222, 127
        %v251 = vpop.permute.xlu0 %250
        %252 = vrot.lane.b32.xlu0 %v223, 127
        %v253 = vpop.permute.xlu0 %252
        %vm254 = vcmp.lt.s32.totalorder %v174, 127
        %v255 = vsel %vm254, %v251, %v253
        %v256 = vsel %vm254, %v253, %v251
        %v257 = vsel %vm206, 1, 0
        %v258 = vsel %vm207, 1, 0
        %vm259 = vcmp.eq.s32.totalorder %v257, 1
        %vm260 = vcmp.eq.s32.totalorder %v258, 1
        %v261 = vsel %vm259, %v222, %v255
        %v262 = vsel %vm260, %v223, %v256
        %263 = vrot.lane.b32.xlu0 %v208, 1
        %v264 = vpop.permute.xlu0 %263
        %265 = vrot.lane.b32.xlu0 %v210, 1
        %v266 = vpop.permute.xlu0 %265
        %v267 = vsel %vm241, %v264, %v266
        %v268 = vsel %vm241, %v266, %v264
        %v269 = vsel %vm246, %v208, %v268
        %v270 = vsel %vm247, %v210, %v267
        %271 = vrot.lane.b32.xlu0 %v208, 127
        %v272 = vpop.permute.xlu0 %271
        %273 = vrot.lane.b32.xlu0 %v210, 127
        %v274 = vpop.permute.xlu0 %273
        %v275 = vsel %vm254, %v272, %v274
        %v276 = vsel %vm254, %v274, %v272
        %v277 = vsel %vm259, %v208, %v275
        %v278 = vsel %vm260, %v210, %v276
        %279 = vrot.lane.b32.xlu0 %v235, 1
        %v280 = vpop.permute.xlu0 %279
        %281 = vrot.lane.b32.xlu0 %v236, 1
        %v282 = vpop.permute.xlu0 %281
        %v283 = vsel %vm241, %v280, %v282
        %v284 = vsel %vm241, %v282, %v280
        %v285 = vsel %vm246, %v235, %v284
        %v286 = vsel %vm247, %v236, %v283
        %287 = vrot.lane.b32.xlu0 %v235, 127
        %v288 = vpop.permute.xlu0 %287
        %289 = vrot.lane.b32.xlu0 %v236, 127
        %v290 = vpop.permute.xlu0 %289
        %v291 = vsel %vm254, %v288, %v290
        %v292 = vsel %vm254, %v290, %v288
        %v293 = vsel %vm259, %v235, %v291
        %v294 = vsel %vm260, %v236, %v292
        %v297 = vrot.slane %v222, 4
        %v298 = vrot.slane %v223, 4
        %v303 = vrot.slane %v269, 4
        %v304 = vrot.slane %v270, 4
        %v309 = vrot.slane %v277, 4
        %v310 = vrot.slane %v278, 4
        %v315 = vrot.slane %v235, 4
        %v316 = vrot.slane %v236, 4
        %vm319 = vcmask 1043456
        %v320 = vsel %vm319, %v248, %v297
        %v321 = vsel %vm319, %v249, %v298
        %v322 = vsel %vm319, %v261, %v303
        %v323 = vsel %vm319, %v262, %v304
        %v324 = vsel %vm319, %v208, %v309
        %v325 = vsel %vm319, %v210, %v310
        %v326 = vsel %vm319, %v285, %v315
        %v327 = vsel %vm319, %v286, %v316
        %v328 = vsel %vm319, %v293, 1.0
        %v329 = vsel %vm319, %v294, 1.0
        %vm330 = vcmask 1044480
        %v331 = vsel %vm330, %v328, 0.0
        %v332 = vsel %vm330, %v329, 0.0
        %v333 = vld [vmem:[#allocation5] sm:$0xff]
        %vm334 = vcmask 326656
        %v336 = vsel %vm334, %v333, 0
        %338 = vmatprep.subr.mxu0 0.0
        %339 = vmatpush1.msra.mxu0 0.0
        %340 = vmatprep.subr.mxu0 0.0
        %341 = vmatpush1.msra.mxu0 0.0
        %342 = vmatprep.subr.mxu0 0.0
        %343 = vmatpush1.msra.mxu0 0.0
        %344 = vmatprep.subr.mxu0 0.0
        %345 = vmatpush1.msra.mxu0 0.0
        %346 = vmatprep.subr.mxu0 0.0
        %347 = vmatpush1.msra.mxu0 0.0
        %348 = vmatprep.subr.mxu0 0.0
        %349 = vmatpush1.msra.mxu0 0.0
        %350 = vmatprep.subr.mxu0 0.0
        %351 = vmatpush1.msra.mxu0 0.0
        %352 = vmatprep.subr.mxu0 0.0
        %353 = vmatpush1.msra.mxu0 0.0
        %354 = vmatprep.subr.mxu0 0.0
        %355 = vmatpush1.msra.mxu0 0.0
        %356 = vmatprep.subr.mxu0 0.0
        %357 = vmatpush1.msra.mxu0 0.0
        %358 = vmatprep.subr.mxu0 0.0
        %359 = vmatpush1.msra.mxu0 0.0
        %360 = vmatprep.subr.mxu0 %v332
        %361 = vmatpush1.msra.mxu0 %v331
        %362 = vmatprep.subr.mxu0 %v327
        %363 = vmatpush1.msra.mxu0 %v326
        %364 = vmatprep.subr.mxu0 %v325
        %365 = vmatpush1.msra.mxu0 %v324
        %366 = vmatprep.subr.mxu0 %v323
        %367 = vmatpush1.msra.mxu0 %v322
        %368 = vmatprep.subr.mxu0 %v321
        %369 = vmatpush1.msra.mxu0 %v320
        %370 = vmatprep.subr.mxu0 0.0
        %371 = vmatpush2.msra.mxu0 0.0
        %372 = vmatprep.subr.mxu0 0.0
        %373 = vmatpush2.msra.mxu0 0.0
        %374 = vmatprep.subr.mxu0 0.0
        %375 = vmatpush2.msra.mxu0 0.0
        %376 = vmatprep.subr.mxu0 0.0
        %377 = vmatpush2.msra.mxu0 0.0
        %378 = vmatprep.subr.mxu0 0.0
        %379 = vmatpush2.msra.mxu0 0.0
        %380 = vmatprep.subr.mxu0 0.0
        %381 = vmatpush2.msra.mxu0 0.0
        %382 = vmatprep.subr.mxu0 0.0
        %383 = vmatpush2.msra.mxu0 0.0
        %384 = vmatprep.subr.mxu0 0.0
        %385 = vmatpush2.msra.mxu0 0.0
        %386 = vmatprep.subr.mxu0 0.0
        %387 = vmatpush2.msra.mxu0 0.0
        %388 = vmatprep.subr.mxu0 0.0
        %389 = vmatpush2.msra.mxu0 0.0
        %390 = vmatprep.subr.mxu0 0.0
        %391 = vmatpush2.msra.mxu0 0.0
        %392 = vmatprep.subr.mxu0 0.0
        %393 = vmatpush2.msra.mxu0 0.0
        %394 = vmatprep.subr.mxu0 0.0
        %395 = vmatpush2.msra.mxu0 0.0
        %396 = vmatprep.subr.mxu0 0.0
        %397 = vmatpush2.msra.mxu0 0.0
        %398 = vmatprep.subr.mxu0 0.0
        %399 = vmatpush2.msra.mxu0 0.0
        %400 = vmatprep.subr.mxu0 0.0
        %401 = vmatpush2.msra.mxu0 0.0
        %402 = vmatprep.mubr.f32.mxu0 0.0
        %403 = vmatmul.mubr.f32.gmra.mxu0 %v336
        %v404 = vpop.f32.mrf.mxu0
        %v405 = vadd.f32 0.0, %v404
        %v406 = vpop.f32.mrf.mxu0
        %v407 = vadd.f32 0.0, %v406
        %408 = vdwg.mxu0
        %v409 = vtanh.pop %v405
        %v410 = vtanh.pop %v407
        %411 = vst [vmem:[%s172] sm:$0xff] %v409
        %412 = vst [vmem:[%s172 + $0x8] sm:$0xff] %v410
        %s413 = sand.u32 %s75, 1
        %s414 = scalar_lea.sflag [#allocation4], %s413
        %s415 = sand.u32 %s75, 1
        %s416 = smul.addr %s415, 16
        %s417 = scalar_lea.vmem [#allocation7], %s416
        // Predicated region
        $region37: #{tpu_custom_call.1} parent=27 // pred_check
          %p418 = pneg %p85
        $region38: #{tpu_custom_call.1} parent=27 // pred_check_branch
          %420 = sbr.rel (%p418) target = $region40
        $region39: #{tpu_custom_call.1} parent=27 // pred_region
          %s422 = ssub.s32 256, 256
          %423 = vsyncadd %s414, %s422
          %s424 = smul.addr %s20, 2
          %s425 = smul.addr %s424, 128
          %s426 = scalar_lea.hbm %s2, %s425
          %s428 = sshll.u32 %s417, 4
          %s429 = int_to_ptr.vmem [resolvable:$true] %s428
          %431 = dma.vmem_to_hbm [thread:$0]  %s429, 256, %s426, %s414
        $region40: #{tpu_custom_call.1} parent=27 // pred_fallthru
          _
      $region28: #{tpu_custom_call.1} parent=5 // pred_fallthru
        _
      %p432 = scmp.le.s32.totalorder 2, %s15
      // Predicated region
      $region41: #{tpu_custom_call.1} parent=5 // pred_check
        %p433 = pneg %p432
      $region42: #{tpu_custom_call.1} parent=5 // pred_check_branch
        %435 = sbr.rel (%p433) target = $region44
      $region43: #{tpu_custom_call.1} parent=5 // pred_region
        %s436 = ssub.s32 %s15, 2
        // Predicated region
        $region45: #{tpu_custom_call.1} parent=43 // pred_check
          %p437 = pneg %p91
        $region46: #{tpu_custom_call.1} parent=43 // pred_check_branch
          %439 = sbr.rel (%p437) target = $region48
        $region47: #{tpu_custom_call.1} parent=43 // pred_region
          %s440 = sand.u32 %s76, 1
          %s441 = scalar_lea.sflag [#allocation4], %s440
          %s442 = sand.u32 %s76, 1
          %s443 = smul.addr %s442, 16
          %s444 = scalar_lea.vmem [#allocation7], %s443
          %445 = dma.done %s441, 256
        $region48: #{tpu_custom_call.1} parent=43 // pred_fallthru
          _
      $region44: #{tpu_custom_call.1} parent=5 // pred_fallthru
        _
    $region6: #{tpu_custom_call.1} parent=1 // loop_footer
      %s19 = sadd.s32 1, %s15
    $region7: #{tpu_custom_call.1} parent=1 // loop_footer_branch
      %14 = sbr.rel target = $region3
    $region8: #{tpu_custom_call.1} parent=1 // loop_exit
      _
    %446 = vsyncpa [#allocation3], 1
    %s447 = scalar_lea.sflag [#allocation3], 1
    %448 = vsyncpa %s447, 1
    %449 = vsyncpa [#allocation6], 1
    %450 = vsyncpa [#allocation4], 1
    %s451 = scalar_lea.sflag [#allocation4], 1
    %452 = vsyncpa %s451, 1

</llo_original>
